<compile_context>
chip_gen: v7x
topology: tpu7x:2x2x1
jax: 0.10.0
libtpu: 0.0.40
codegen_flags: <defaults>
</compile_context>

<pallas_src>
import jax
import jax.numpy as jnp
from jax.experimental import pallas as pl
from jax.experimental.pallas import tpu as pltpu

NUM_DEGREES = 6


def _round_up(x, m):
    return ((x + m - 1) // m) * m


def nfpconv_kernel(x_ref, deg_ref, ids_ref, w_ref, b_ref, o_ref):
    # x_ref  : (tm, F)   bf16   summed atom+bond features
    # deg_ref: (tm, 1)   int32  atom degree (-1 on padding rows)
    # ids_ref: (1, 6)    int32  degree ids [0..5] (resident constant)
    # w_ref  : (F, 6*O)  bf16   per-degree weights fused along lanes
    # b_ref  : (1, O)    f32    bias (added once, after the degree select)
    # o_ref  : (tm, O)   f32    output
    O = o_ref.shape[-1]

    # Single lane-dense MXU pass (N = 6*O), f32 accumulation.
    y = jnp.dot(x_ref[...], w_ref[...], preferred_element_type=jnp.float32)

    # One-hot degree masks via a single broadcast compare -> (tm, 6) f32.
    oh = (deg_ref[...] == ids_ref[...]).astype(jnp.float32)

    # Per-degree select BEFORE bias + relu.  Masks are disjoint and every real
    # row matches exactly one degree, so
    #   sum_d relu(x@W_d + b) * (deg==d)  ==  relu(sum_d (x@W_d)*(deg==d) + b).
    # This keeps bias/relu/cast on the (tm, O) result instead of the 6x larger
    # (tm, 6*O) slab -- the main VMEM-traffic saving in this kernel.
    acc = y[:, 0:O] * oh[:, 0:1]
    for d in range(1, NUM_DEGREES):
        acc = acc + y[:, d * O:(d + 1) * O] * oh[:, d:d + 1]

    # Padding rows (deg == -1) give acc == 0 -> relu(b); they are sliced off
    # in the wrapper, so semantics for real rows are unchanged.
    o_ref[...] = jnp.maximum(acc + b_ref[...], 0.0).astype(o_ref.dtype)


def nfp_conv_pallas(summed_features, atom_degrees, w_cat, bias, *, tm=2048):
    """summed_features: (M, F) bf16, atom_degrees: (M, 1) int32,
    w_cat: (F, 6*O) bf16, bias: (1, O) f32  ->  (M, O) f32."""
    M, F = summed_features.shape
    SIX_O = w_cat.shape[-1]
    O = SIX_O // NUM_DEGREES

    # Row tile: big by default to amortise per-step pipeline overhead; clamp
    # for small problems (keep it 16-aligned for bf16 sublane packing).
    tm = max(16, min(tm, _round_up(M, 16)))
    M_pad = _round_up(M, tm)
    if M_pad != M:
        pad = M_pad - M
        summed_features = jnp.pad(summed_features, ((0, pad), (0, 0)))
        # Degree -1 on padding rows: no one-hot branch matches.
        atom_degrees = jnp.pad(atom_degrees, ((0, pad), (0, 0)),
                               constant_values=-1)

    degree_ids = jnp.arange(NUM_DEGREES, dtype=jnp.int32).reshape(1, NUM_DEGREES)

    out = pl.pallas_call(
        nfpconv_kernel,
        out_shape=jax.ShapeDtypeStruct((M_pad, O), jnp.float32),
        grid_spec=pltpu.PrefetchScalarGridSpec(
            num_scalar_prefetch=0,
            grid=(M_pad // tm,),
            in_specs=[
                pl.BlockSpec((tm, F), lambda i: (i, 0)),
                pl.BlockSpec((tm, 1), lambda i: (i, 0)),
                # Grid-invariant operands: constant index_map keeps them
                # resident in VMEM across all grid steps (no re-DMA).
                pl.BlockSpec((1, NUM_DEGREES), lambda i: (0, 0)),
                pl.BlockSpec((F, SIX_O), lambda i: (0, 0)),
                pl.BlockSpec((1, O), lambda i: (0, 0)),
            ],
            out_specs=pl.BlockSpec((tm, O), lambda i: (i, 0)),
        ),
        compiler_params=pltpu.CompilerParams(
            # Parallel row axis -> shards across both TensorCores on v7x.
            dimension_semantics=("parallel",)),
    )(summed_features, atom_degrees, degree_ids, w_cat,
      bias.astype(jnp.float32))
    return out[:M]


def nfp_conv_forward(atoms, bonds, edges, deg_w, bias, *, tm=2048):
    """Matches nfpConv.forward((atoms, bonds, edges)) with include_self=True."""
    B, A, Fa = atoms.shape
    # atom_degrees = (edges != -1).sum(-1, keepdim=True)
    atom_degrees = jnp.sum((edges != -1).astype(jnp.int32), axis=-1, keepdims=True)
    # GraphLookup: pad a zero row at atom index 0, shift edges by +1, gather.
    masked_atoms = jnp.pad(atoms, ((0, 0), (1, 0), (0, 0)))        # (B, A+1, Fa)
    masked_edges = edges + 1                                        # (B, A, D)
    neighbor = jax.vmap(lambda a, e: a[e])(masked_atoms, masked_edges)  # (B,A,D,Fa)
    # include_self=True: prepend self features then sum  ==  self + neighbor-sum
    summed_atom_features = atoms + neighbor.sum(axis=-2)            # (B, A, Fa)
    summed_bond_features = bonds.sum(axis=-2)                       # (B, A, Fb)
    summed_features = jnp.concatenate(
        [summed_atom_features, summed_bond_features], axis=-1)      # (B, A, Fa+Fb)

    F = summed_features.shape[-1]
    O = deg_w.shape[-1]
    # Fuse the 6 per-degree weights into one lane-dense (F, 6*O) operand.
    # bf16 matmul operands halve the dominant HBM read; accumulation stays f32.
    w_cat = (jnp.transpose(deg_w, (1, 0, 2))
             .reshape(F, NUM_DEGREES * O).astype(jnp.bfloat16))

    out = nfp_conv_pallas(
        summed_features.reshape(B * A, F).astype(jnp.bfloat16),
        atom_degrees.reshape(B * A, 1).astype(jnp.int32),
        w_cat, bias, tm=tm)
    return out.reshape(B, A, O)


def nfp_conv_ref(atoms, bonds, edges, deg_w, bias):
    """Pure-JAX f32 reference reproducing the PyTorch forward."""
    atom_degrees = jnp.sum((edges != -1).astype(jnp.int32), axis=-1, keepdims=True)
    masked_atoms = jnp.pad(atoms, ((0, 0), (1, 0), (0, 0)))
    neighbor = jax.vmap(lambda a, e: a[e])(masked_atoms, edges + 1)
    summed_atom = atoms + neighbor.sum(axis=-2)
    summed_bond = bonds.sum(axis=-2)
    sf = jnp.concatenate([summed_atom, summed_bond], axis=-1)
    new_features = None
    for d in range(NUM_DEGREES):
        mask = (atom_degrees == d).astype(jnp.float32)
        y = jax.nn.relu(sf @ deg_w[d] + bias) * mask
        new_features = y if d == 0 else new_features + y
    return new_features


if __name__ == "__main__":
    key = jax.random.PRNGKey(0)
    B, A, D = 2, 16, 5          # batch, max_atoms, max_degree
    Fa, Fb = 26, 6              # atom features (ishape), bond features
    ishape, oshape = Fa, 32
    F = ishape + 6              # degArr input dim (Fa + Fb with Fb == 6)

    k1, k2, k3, k4, k5 = jax.random.split(key, 5)
    atoms = jax.random.normal(k1, (B, A, Fa), jnp.float32)
    bonds = jax.random.normal(k2, (B, A, D, Fb), jnp.float32)
    edges = jax.random.randint(k3, (B, A, D), -1, A, jnp.int32)

    # Deterministic parameter init (xavier-normal std, constant bias 0.01).
    xav_std = (2.0 / (F + oshape)) ** 0.5
    deg_w = xav_std * jax.random.normal(k4, (NUM_DEGREES, F, oshape), jnp.float32)
    bias = jnp.full((1, oshape), 0.01, jnp.float32)
    # self.w exists in __init__ but is never used in forward; keep for parity.
    _w_unused = ((2.0 / (ishape + oshape)) ** 0.5) * jax.random.normal(
        k5, (ishape, oshape), jnp.float32)

    out = jax.block_until_ready(nfp_conv_forward(atoms, bonds, edges, deg_w, bias))
    ref = jax.block_until_ready(nfp_conv_ref(atoms, bonds, edges, deg_w, bias))

    assert out.shape == (B, A, oshape)
    # bf16 matmul operands -> relaxed tolerance vs the pure-f32 reference.
    assert jnp.allclose(out, ref, atol=5e-2, rtol=5e-2), "mismatch vs reference"
    print("KERNEL_OK")
</pallas_src>

<mosaic_0001>
module attributes {stable_mosaic.version = 11 : i64} {
  func.func @nfpconv_kernel(%arg0: i32, %arg1: memref<32x32xbf16, #tpu.memory_space<vmem>>, %arg2: memref<32x1xi32, #tpu.memory_space<vmem>>, %arg3: memref<1x6xi32, #tpu.memory_space<vmem>>, %arg4: memref<32x192xbf16, #tpu.memory_space<vmem>>, %arg5: memref<1x32xf32, #tpu.memory_space<vmem>>, %arg6: memref<32x32xf32, #tpu.memory_space<vmem>>) attributes {dimension_semantics = [#tpu.dimension_semantics<parallel>], iteration_bounds = array<i64: 1>, scalar_prefetch = 0 : i64, scratch_operands = 0 : i64, tpu.core_type = #tpu.core_type<tc>, window_params = [{transform_indices = @transform_0, window_bounds = array<i64: 32, 32>}, {transform_indices = @transform_1, window_bounds = array<i64: 32, 1>}, {pipeline_mode = #tpu.pipeline_mode<synchronous>, transform_indices = @transform_2, window_bounds = array<i64: 1, 6>}, {pipeline_mode = #tpu.pipeline_mode<synchronous>, transform_indices = @transform_3, window_bounds = array<i64: 32, 192>}, {pipeline_mode = #tpu.pipeline_mode<synchronous>, transform_indices = @transform_4, window_bounds = array<i64: 1, 32>}, {transform_indices = @transform_5, window_bounds = array<i64: 32, 32>}]} {
    %c0 = arith.constant 0 : index
    %c0_0 = arith.constant 0 : index
    %0 = vector.load %arg1[%c0, %c0_0] : memref<32x32xbf16, #tpu.memory_space<vmem>>, vector<32x32xbf16>
    %c0_1 = arith.constant 0 : index
    %c0_2 = arith.constant 0 : index
    %1 = vector.load %arg4[%c0_1, %c0_2] : memref<32x192xbf16, #tpu.memory_space<vmem>>, vector<32x192xbf16>
    %cst = arith.constant dense<0.000000e+00> : vector<32x192xf32>
    %2 = tpu.matmul %0, %1, %cst {dimension_numbers = #tpu.dot_dimension_numbers<[1], [0], [0], [1], [0, 0, 1, 1], [], []>} : vector<32x32xbf16>, vector<32x192xbf16>, vector<32x192xf32> -> vector<32x192xf32>
    %c0_3 = arith.constant 0 : index
    %c0_4 = arith.constant 0 : index
    %3 = vector.load %arg2[%c0_3, %c0_4] : memref<32x1xi32, #tpu.memory_space<vmem>>, vector<32x1xi32>
    %c0_5 = arith.constant 0 : index
    %c0_6 = arith.constant 0 : index
    %4 = vector.load %arg3[%c0_5, %c0_6] : memref<1x6xi32, #tpu.memory_space<vmem>>, vector<1x6xi32>
    %5 = vector.broadcast %3 : vector<32x1xi32> to vector<32x6xi32>
    %6 = vector.broadcast %4 : vector<1x6xi32> to vector<32x6xi32>
    %7 = arith.cmpi eq, %5, %6 : vector<32x6xi32>
    %8 = arith.extui %7 : vector<32x6xi1> to vector<32x6xi32>
    %9 = arith.sitofp %8 : vector<32x6xi32> to vector<32x6xf32>
    %10 = vector.extract_strided_slice %2 {offsets = [0, 0], sizes = [32, 32], strides = [1, 1]} : vector<32x192xf32> to vector<32x32xf32>
    %11 = vector.extract_strided_slice %9 {offsets = [0, 0], sizes = [32, 1], strides = [1, 1]} : vector<32x6xf32> to vector<32x1xf32>
    %12 = vector.broadcast %11 : vector<32x1xf32> to vector<32x32xf32>
    %13 = arith.mulf %10, %12 : vector<32x32xf32>
    %14 = vector.extract_strided_slice %2 {offsets = [0, 32], sizes = [32, 32], strides = [1, 1]} : vector<32x192xf32> to vector<32x32xf32>
    %15 = vector.extract_strided_slice %9 {offsets = [0, 1], sizes = [32, 1], strides = [1, 1]} : vector<32x6xf32> to vector<32x1xf32>
    %16 = vector.broadcast %15 : vector<32x1xf32> to vector<32x32xf32>
    %17 = arith.mulf %14, %16 : vector<32x32xf32>
    %18 = arith.addf %13, %17 : vector<32x32xf32>
    %19 = vector.extract_strided_slice %2 {offsets = [0, 64], sizes = [32, 32], strides = [1, 1]} : vector<32x192xf32> to vector<32x32xf32>
    %20 = vector.extract_strided_slice %9 {offsets = [0, 2], sizes = [32, 1], strides = [1, 1]} : vector<32x6xf32> to vector<32x1xf32>
    %21 = vector.broadcast %20 : vector<32x1xf32> to vector<32x32xf32>
    %22 = arith.mulf %19, %21 : vector<32x32xf32>
    %23 = arith.addf %18, %22 : vector<32x32xf32>
    %24 = vector.extract_strided_slice %2 {offsets = [0, 96], sizes = [32, 32], strides = [1, 1]} : vector<32x192xf32> to vector<32x32xf32>
    %25 = vector.extract_strided_slice %9 {offsets = [0, 3], sizes = [32, 1], strides = [1, 1]} : vector<32x6xf32> to vector<32x1xf32>
    %26 = vector.broadcast %25 : vector<32x1xf32> to vector<32x32xf32>
    %27 = arith.mulf %24, %26 : vector<32x32xf32>
    %28 = arith.addf %23, %27 : vector<32x32xf32>
    %29 = vector.extract_strided_slice %2 {offsets = [0, 128], sizes = [32, 32], strides = [1, 1]} : vector<32x192xf32> to vector<32x32xf32>
    %30 = vector.extract_strided_slice %9 {offsets = [0, 4], sizes = [32, 1], strides = [1, 1]} : vector<32x6xf32> to vector<32x1xf32>
    %31 = vector.broadcast %30 : vector<32x1xf32> to vector<32x32xf32>
    %32 = arith.mulf %29, %31 : vector<32x32xf32>
    %33 = arith.addf %28, %32 : vector<32x32xf32>
    %34 = vector.extract_strided_slice %2 {offsets = [0, 160], sizes = [32, 32], strides = [1, 1]} : vector<32x192xf32> to vector<32x32xf32>
    %35 = vector.extract_strided_slice %9 {offsets = [0, 5], sizes = [32, 1], strides = [1, 1]} : vector<32x6xf32> to vector<32x1xf32>
    %36 = vector.broadcast %35 : vector<32x1xf32> to vector<32x32xf32>
    %37 = arith.mulf %34, %36 : vector<32x32xf32>
    %38 = arith.addf %33, %37 : vector<32x32xf32>
    %c0_7 = arith.constant 0 : index
    %c0_8 = arith.constant 0 : index
    %39 = vector.load %arg5[%c0_7, %c0_8] : memref<1x32xf32, #tpu.memory_space<vmem>>, vector<1x32xf32>
    %40 = vector.broadcast %39 : vector<1x32xf32> to vector<32x32xf32>
    %41 = arith.addf %38, %40 : vector<32x32xf32>
    %cst_9 = arith.constant 0.000000e+00 : f32
    %42 = vector.broadcast %cst_9 : f32 to vector<32x32xf32>
    %43 = arith.maximumf %41, %42 : vector<32x32xf32>
    %c0_10 = arith.constant 0 : index
    %c0_11 = arith.constant 0 : index
    %44 = vector.load %arg6[%c0_10, %c0_11] : memref<32x32xf32, #tpu.memory_space<vmem>>, vector<32x32xf32>
    tpu.vector_store %arg6[%c0_10, %c0_11], %43 {strides = array<i32>} : memref<32x32xf32, #tpu.memory_space<vmem>>, vector<32x32xf32>,
    return
  }
  func.func @transform_0(%arg0: i32) -> (i32, i32) {
    %c0_i32 = arith.constant 0 : i32
    %c0_i32_0 = arith.constant 0 : i32
    return %arg0, %c0_i32 : i32, i32
  }
  func.func @transform_1(%arg0: i32) -> (i32, i32) {
    %c0_i32 = arith.constant 0 : i32
    %c0_i32_0 = arith.constant 0 : i32
    return %arg0, %c0_i32 : i32, i32
  }
  func.func @transform_2(%arg0: i32) -> (i32, i32) {
    %c0_i32 = arith.constant 0 : i32
    %c0_i32_0 = arith.constant 0 : i32
    %c0_i32_1 = arith.constant 0 : i32
    return %c0_i32, %c0_i32_0 : i32, i32
  }
  func.func @transform_3(%arg0: i32) -> (i32, i32) {
    %c0_i32 = arith.constant 0 : i32
    %c0_i32_0 = arith.constant 0 : i32
    %c0_i32_1 = arith.constant 0 : i32
    return %c0_i32, %c0_i32_0 : i32, i32
  }
  func.func @transform_4(%arg0: i32) -> (i32, i32) {
    %c0_i32 = arith.constant 0 : i32
    %c0_i32_0 = arith.constant 0 : i32
    %c0_i32_1 = arith.constant 0 : i32
    return %c0_i32, %c0_i32_0 : i32, i32
  }
  func.func @transform_5(%arg0: i32) -> (i32, i32) {
    %c0_i32 = arith.constant 0 : i32
    %c0_i32_0 = arith.constant 0 : i32
    return %arg0, %c0_i32 : i32, i32
  }
}

</mosaic_0001>

<llo_original>
// kernel: tpu_custom_call.1
$region0: #{tpu_custom_call.1}
  #allocation0 [shape = 'u32[]', space=smem, size = 0x4, offset = 0x4, fixed_abs, tag = 'smem constant byte address 0x4 - core index']
  #allocation1 [shape = 'u32[144,128]{1,0:T(1,128)}', space=vmem, size = 0x12000, scoped, tag = 'internal scratch']
  %s0 = inlined_call_operand.hbm [shape: bf16[32,32], index: 0, kind: input, shape index: {}]
  %s1 = inlined_call_operand.vmem [shape: s32[32,1], index: 1, kind: input, shape index: {}]
  %s2 = inlined_call_operand.vmem [shape: s32[1,6], index: 2, kind: input, shape index: {}]
  %s3 = inlined_call_operand.vmem [shape: bf16[32,192], index: 3, kind: input, shape index: {}]
  %s4 = inlined_call_operand.vmem [shape: f32[1,32], index: 4, kind: input, shape index: {}]
  %s5 = inlined_call_operand.hbm [shape: f32[32,32], index: 5, kind: output, shape index: {}]
  %s6 = sld [smem:[#allocation0]]
  $region34: #{tpu_custom_call.1} parent=0
    _
  %s8 = ssub.s32 1, %s6
  %s9 = scalar_select 0, %s8, %s6
  $region1: #{tpu_custom_call.1} parent=0
    #allocation2 [shape = 'u8[8192]{0}', space=vmem, size = 0x2000, scoped, tag = 'input window, operand 0, single buffered']
    #allocation3 [shape = 's32[1]{0}', space=sflag, size = 0x4, scoped, tag = 'scoped memory for tpu_custom_call.1']
    #allocation4 [shape = 's32[1]{0}', space=sflag, size = 0x4, scoped, tag = 'scoped memory for tpu_custom_call.1']
    #allocation5 [shape = 'u8[16384]{0}', space=vmem, size = 0x4000, scoped, tag = 'output window, operand 0, single buffered']
    %10 = vsyncpa [#allocation3], 0
    %11 = vsyncpa [#allocation4], 0
    // Predicated region
    $region2: #{tpu_custom_call.1} parent=1 // pred_check
      _
    $region3: #{tpu_custom_call.1} parent=1 // pred_check_branch
      %13 = sbr.rel (0) target = $region5
    $region4: #{tpu_custom_call.1} parent=1 // pred_region
      %s15 = ssub.s32 256, 256
      %16 = vsyncadd [#allocation3], %s15
      %s17 = sshll.u32 [#allocation2], 4
      %s18 = int_to_ptr.vmem [resolvable:$true] %s17
      %23 = dma.hbm_to_vmem [thread:$0]  %s0, 256, %s18, [#allocation3], 64, 64, 4
    $region5: #{tpu_custom_call.1} parent=1 // pred_fallthru
      _
    // Predicated region
    $region6: #{tpu_custom_call.1} parent=1 // pred_check
      _
    $region7: #{tpu_custom_call.1} parent=1 // pred_check_branch
      %25 = sbr.rel (0) target = $region9
    $region8: #{tpu_custom_call.1} parent=1 // pred_region
      _
    $region9: #{tpu_custom_call.1} parent=1 // pred_fallthru
      _
    // Predicated region
    $region10: #{tpu_custom_call.1} parent=1 // pred_check
      _
    $region11: #{tpu_custom_call.1} parent=1 // pred_check_branch
      %27 = sbr.rel (0) target = $region13
    $region12: #{tpu_custom_call.1} parent=1 // pred_region
      _
    $region13: #{tpu_custom_call.1} parent=1 // pred_fallthru
      _
    // Predicated region
    $region14: #{tpu_custom_call.1} parent=1 // pred_check
      _
    $region15: #{tpu_custom_call.1} parent=1 // pred_check_branch
      %29 = sbr.rel (0) target = $region17
    $region16: #{tpu_custom_call.1} parent=1 // pred_region
      _
    $region17: #{tpu_custom_call.1} parent=1 // pred_fallthru
      _
    // Predicated region
    $region18: #{tpu_custom_call.1} parent=1 // pred_check
      _
    $region19: #{tpu_custom_call.1} parent=1 // pred_check_branch
      %31 = sbr.rel (0) target = $region21
    $region20: #{tpu_custom_call.1} parent=1 // pred_region
      _
    $region21: #{tpu_custom_call.1} parent=1 // pred_fallthru
      _
    // Predicated region
    $region22: #{tpu_custom_call.1} parent=1 // pred_check
      _
    $region23: #{tpu_custom_call.1} parent=1 // pred_check_branch
      %33 = sbr.rel (0) target = $region25
    $region24: #{tpu_custom_call.1} parent=1 // pred_region
      %34 = dma.done [#allocation3], 256
    $region25: #{tpu_custom_call.1} parent=1 // pred_fallthru
      _
    %v36 = vld [vmem:[#allocation2] sm:$0xf]
    %v37 = vld [vmem:[#allocation2 + $0x4] sm:$0xf]
    %v38 = vld [vmem:[#allocation2 + $0x8] sm:$0xf]
    %v39 = vld [vmem:[#allocation2 + $0xc] sm:$0xf]
    %v40 = vld [vmem:[%s3] sm:$0xff]
    %v41 = vld [vmem:[%s3 + $0x8] sm:$0xff]
    %v42 = vld [vmem:[%s3 + $0x10] sm:$0xff]
    %v43 = vld [vmem:[%s3 + $0x18] sm:$0xff]
    %v48 = vunpack.c.l.b16 %v36
    %v49 = vunpack.c.l.b16 %v37
    %v50 = vunpack.c.l.b16 %v38
    %v51 = vunpack.c.l.b16 %v39
    %v52 = vpack.c.b16 %v49, %v48
    %v53 = vpack.c.b16 %v51, %v50
    %v58 = vunpack.c.l.b16 %v40
    %v59 = vunpack.c.h.b16 %v40
    %v60 = vunpack.c.l.b16 %v41
    %v61 = vunpack.c.h.b16 %v41
    %v62 = vunpack.c.l.b16 %v42
    %v63 = vunpack.c.h.b16 %v42
    %v64 = vunpack.c.l.b16 %v43
    %v65 = vunpack.c.h.b16 %v43
    %v66 = vpack.c.b16 %v60, %v58
    %v67 = vpack.c.b16 %v61, %v59
    %v68 = vpack.c.b16 %v64, %v62
    %v69 = vpack.c.b16 %v65, %v63
    %vm74 = vcmask 261120
    %v76 = vsel %vm74, %v52, 0
    %v79 = vsel %vm74, %v53, 0
    %81 = vmatprep.subr.bf16.mxu0 %v67
    %82 = vmatpush1.bf16.msra.mxu0 %v66
    %83 = vmatprep.subr.bf16.mxu0 %v69
    %84 = vmatpush1.bf16.msra.mxu0 %v68
    %85 = vmatprep.subr.bf16.mxu0 0
    %86 = vmatpush1.bf16.msra.mxu0 0
    %87 = vmatprep.subr.bf16.mxu0 0
    %88 = vmatpush1.bf16.msra.mxu0 0
    %89 = vmatprep.subr.bf16.mxu0 0
    %90 = vmatpush1.bf16.msra.mxu0 0
    %91 = vmatprep.subr.bf16.mxu0 0
    %92 = vmatpush1.bf16.msra.mxu0 0
    %93 = vmatprep.subr.bf16.mxu0 0
    %94 = vmatpush1.bf16.msra.mxu0 0
    %95 = vmatprep.subr.bf16.mxu0 0
    %96 = vmatpush1.bf16.msra.mxu0 0
    %97 = vmatprep.subr.bf16.mxu0 0
    %98 = vmatpush1.bf16.msra.mxu0 0
    %99 = vmatprep.subr.bf16.mxu0 0
    %100 = vmatpush1.bf16.msra.mxu0 0
    %101 = vmatprep.subr.bf16.mxu0 0
    %102 = vmatpush1.bf16.msra.mxu0 0
    %103 = vmatprep.subr.bf16.mxu0 0
    %104 = vmatpush1.bf16.msra.mxu0 0
    %105 = vmatprep.subr.bf16.mxu0 0
    %106 = vmatpush1.bf16.msra.mxu0 0
    %107 = vmatprep.subr.bf16.mxu0 0
    %108 = vmatpush1.bf16.msra.mxu0 0
    %109 = vmatprep.subr.bf16.mxu0 0
    %110 = vmatpush1.bf16.msra.mxu0 0
    %111 = vmatprep.subr.bf16.mxu0 0
    %112 = vmatpush1.bf16.msra.mxu0 0
    %113 = vmatprep.mubr.bf16.mxu0 0
    %114 = vmatmul.mubr.bf16.gmra.mrb[0].mxu0 %v76
    %v115 = vpop.f32.mrb[0].mxu0
    %v116 = vadd.f32 0.0, %v115
    %v117 = vpop.f32.mrb[0].mxu0
    %v118 = vadd.f32 0.0, %v117
    %v119 = vpop.f32.mrb[0].mxu0
    %v120 = vadd.f32 0.0, %v119
    %v121 = vpop.f32.mrb[0].mxu0
    %v122 = vadd.f32 0.0, %v121
    %123 = vmatprep.mubr.bf16.mxu0 0
    %124 = vmatmul.mubr.bf16.gmra.mrb[0].mxu0 %v79
    %v125 = vpop.f32.mrb[0].mxu0
    %v126 = vadd.f32 0.0, %v125
    %v127 = vpop.f32.mrb[0].mxu0
    %v128 = vadd.f32 0.0, %v127
    %v129 = vpop.f32.mrb[0].mxu0
    %v130 = vadd.f32 0.0, %v129
    %v131 = vpop.f32.mrb[0].mxu0
    %v132 = vadd.f32 0.0, %v131
    %133 = vdwg.mxu0
    %v134 = vld [vmem:[%s1] sm:$0xff]
    %v135 = vld [vmem:[%s1 + $0x8] sm:$0xff]
    %v136 = vld [vmem:[%s1 + $0x10] sm:$0xff]
    %v137 = vld [vmem:[%s1 + $0x18] sm:$0xff]
    %v138 = vld [vmem:[%s2] sm:$0x1]
    %139 = vset.pattern.permute.xlu0 0
    %140 = vperm.xlu0 %139, %v134
    %v141 = vpop.permute.xlu0 %140
    %142 = vset.pattern.permute.xlu0 0
    %143 = vperm.xlu0 %142, %v135
    %v144 = vpop.permute.xlu0 %143
    %145 = vset.pattern.permute.xlu0 0
    %146 = vperm.xlu0 %145, %v136
    %v147 = vpop.permute.xlu0 %146
    %148 = vset.pattern.permute.xlu0 0
    %149 = vperm.xlu0 %148, %v137
    %v150 = vpop.permute.xlu0 %149
    %v151 = vlaneseq
    %v152 = vshrl.u32 %v151, 7
    %v153 = vsub.s32 0, %v152
    %v154 = vrot.slane %v138, %v153
    %vm155 = vcmp.eq.s32.totalorder %v141, %v154
    %vm156 = vcmp.eq.s32.totalorder %v144, %v154
    %vm157 = vcmp.eq.s32.totalorder %v147, %v154
    %vm158 = vcmp.eq.s32.totalorder %v150, %v154
    %v159 = vsel %vm155, 1, 0
    %v160 = vsel %vm156, 1, 0
    %v161 = vsel %vm157, 1, 0
    %v162 = vsel %vm158, 1, 0
    %v163 = vcvt.s32.f32 %v159
    %v164 = vcvt.s32.f32 %v160
    %v165 = vcvt.s32.f32 %v161
    %v166 = vcvt.s32.f32 %v162
    %168 = vset.pattern.permute.xlu0 0
    %169 = vperm.xlu0 %168, %v163
    %v170 = vpop.permute.xlu0 %169
    %173 = vset.pattern.permute.xlu0 0
    %174 = vperm.xlu0 %173, %v164
    %v175 = vpop.permute.xlu0 %174
    %178 = vset.pattern.permute.xlu0 0
    %179 = vperm.xlu0 %178, %v165
    %v180 = vpop.permute.xlu0 %179
    %183 = vset.pattern.permute.xlu0 0
    %184 = vperm.xlu0 %183, %v166
    %v185 = vpop.permute.xlu0 %184
    %v187 = vmul.f32 %v116, %v170
    %v188 = vmul.f32 %v120, %v175
    %v189 = vmul.f32 %v126, %v180
    %v190 = vmul.f32 %v130, %v185
    %191 = vset.pattern.permute.xlu0 1
    %192 = vperm.xlu0 %191, %v163
    %v193 = vpop.permute.xlu0 %192
    %195 = vset.pattern.permute.xlu0 1
    %196 = vperm.xlu0 %195, %v164
    %v197 = vpop.permute.xlu0 %196
    %199 = vset.pattern.permute.xlu0 1
    %200 = vperm.xlu0 %199, %v165
    %v201 = vpop.permute.xlu0 %200
    %203 = vset.pattern.permute.xlu0 1
    %204 = vperm.xlu0 %203, %v166
    %v205 = vpop.permute.xlu0 %204
    %v207 = vmul.f32 %v116, %v193
    %v208 = vmul.f32 %v120, %v197
    %v209 = vmul.f32 %v126, %v201
    %v210 = vmul.f32 %v130, %v205
    %215 = vrot.lane.b32.xlu0 %v207, 96
    %v216 = vpop.permute.xlu0 %215
    %217 = vrot.lane.b32.xlu0 %v208, 96
    %v218 = vpop.permute.xlu0 %217
    %219 = vrot.lane.b32.xlu0 %v209, 96
    %v220 = vpop.permute.xlu0 %219
    %221 = vrot.lane.b32.xlu0 %v210, 96
    %v222 = vpop.permute.xlu0 %221
    %v227 = vadd.f32 %v187, %v216
    %v228 = vadd.f32 %v188, %v218
    %v229 = vadd.f32 %v189, %v220
    %v230 = vadd.f32 %v190, %v222
    %231 = vset.pattern.permute.xlu0 2
    %232 = vperm.xlu0 %231, %v163
    %v233 = vpop.permute.xlu0 %232
    %235 = vset.pattern.permute.xlu0 2
    %236 = vperm.xlu0 %235, %v164
    %v237 = vpop.permute.xlu0 %236
    %239 = vset.pattern.permute.xlu0 2
    %240 = vperm.xlu0 %239, %v165
    %v241 = vpop.permute.xlu0 %240
    %243 = vset.pattern.permute.xlu0 2
    %244 = vperm.xlu0 %243, %v166
    %v245 = vpop.permute.xlu0 %244
    %v247 = vmul.f32 %v116, %v233
    %v248 = vmul.f32 %v120, %v237
    %v249 = vmul.f32 %v126, %v241
    %v250 = vmul.f32 %v130, %v245
    %255 = vrot.lane.b32.xlu0 %v247, 64
    %v256 = vpop.permute.xlu0 %255
    %257 = vrot.lane.b32.xlu0 %v248, 64
    %v258 = vpop.permute.xlu0 %257
    %259 = vrot.lane.b32.xlu0 %v249, 64
    %v260 = vpop.permute.xlu0 %259
    %261 = vrot.lane.b32.xlu0 %v250, 64
    %v262 = vpop.permute.xlu0 %261
    %v267 = vadd.f32 %v227, %v256
    %v268 = vadd.f32 %v228, %v258
    %v269 = vadd.f32 %v229, %v260
    %v270 = vadd.f32 %v230, %v262
    %271 = vset.pattern.permute.xlu0 3
    %272 = vperm.xlu0 %271, %v163
    %v273 = vpop.permute.xlu0 %272
    %275 = vset.pattern.permute.xlu0 3
    %276 = vperm.xlu0 %275, %v164
    %v277 = vpop.permute.xlu0 %276
    %279 = vset.pattern.permute.xlu0 3
    %280 = vperm.xlu0 %279, %v165
    %v281 = vpop.permute.xlu0 %280
    %283 = vset.pattern.permute.xlu0 3
    %284 = vperm.xlu0 %283, %v166
    %v285 = vpop.permute.xlu0 %284
    %v287 = vmul.f32 %v116, %v273
    %v288 = vmul.f32 %v120, %v277
    %v289 = vmul.f32 %v126, %v281
    %v290 = vmul.f32 %v130, %v285
    %295 = vrot.lane.b32.xlu0 %v287, 32
    %v296 = vpop.permute.xlu0 %295
    %297 = vrot.lane.b32.xlu0 %v288, 32
    %v298 = vpop.permute.xlu0 %297
    %299 = vrot.lane.b32.xlu0 %v289, 32
    %v300 = vpop.permute.xlu0 %299
    %301 = vrot.lane.b32.xlu0 %v290, 32
    %v302 = vpop.permute.xlu0 %301
    %v307 = vadd.f32 %v267, %v296
    %v308 = vadd.f32 %v268, %v298
    %v309 = vadd.f32 %v269, %v300
    %v310 = vadd.f32 %v270, %v302
    %311 = vset.pattern.permute.xlu0 4
    %312 = vperm.xlu0 %311, %v163
    %v313 = vpop.permute.xlu0 %312
    %315 = vset.pattern.permute.xlu0 4
    %316 = vperm.xlu0 %315, %v164
    %v317 = vpop.permute.xlu0 %316
    %319 = vset.pattern.permute.xlu0 4
    %320 = vperm.xlu0 %319, %v165
    %v321 = vpop.permute.xlu0 %320
    %323 = vset.pattern.permute.xlu0 4
    %324 = vperm.xlu0 %323, %v166
    %v325 = vpop.permute.xlu0 %324
    %v327 = vmul.f32 %v118, %v313
    %v328 = vmul.f32 %v122, %v317
    %v329 = vmul.f32 %v128, %v321
    %v330 = vmul.f32 %v132, %v325
    %v331 = vadd.f32 %v307, %v327
    %v332 = vadd.f32 %v308, %v328
    %v333 = vadd.f32 %v309, %v329
    %v334 = vadd.f32 %v310, %v330
    %335 = vset.pattern.permute.xlu0 5
    %336 = vperm.xlu0 %335, %v163
    %v337 = vpop.permute.xlu0 %336
    %339 = vset.pattern.permute.xlu0 5
    %340 = vperm.xlu0 %339, %v164
    %v341 = vpop.permute.xlu0 %340
    %343 = vset.pattern.permute.xlu0 5
    %344 = vperm.xlu0 %343, %v165
    %v345 = vpop.permute.xlu0 %344
    %347 = vset.pattern.permute.xlu0 5
    %348 = vperm.xlu0 %347, %v166
    %v349 = vpop.permute.xlu0 %348
    %v351 = vmul.f32 %v118, %v337
    %v352 = vmul.f32 %v122, %v341
    %v353 = vmul.f32 %v128, %v345
    %v354 = vmul.f32 %v132, %v349
    %359 = vrot.lane.b32.xlu0 %v351, 96
    %v360 = vpop.permute.xlu0 %359
    %361 = vrot.lane.b32.xlu0 %v352, 96
    %v362 = vpop.permute.xlu0 %361
    %363 = vrot.lane.b32.xlu0 %v353, 96
    %v364 = vpop.permute.xlu0 %363
    %365 = vrot.lane.b32.xlu0 %v354, 96
    %v366 = vpop.permute.xlu0 %365
    %v371 = vadd.f32 %v331, %v360
    %v372 = vadd.f32 %v332, %v362
    %v373 = vadd.f32 %v333, %v364
    %v374 = vadd.f32 %v334, %v366
    %v375 = vld [vmem:[%s4] sm:$0x1]
    %v377 = vlaneseq
    %v378 = vshrl.u32 %v377, 7
    %v379 = vsub.s32 0, %v378
    %v380 = vrot.slane %v375, %v379
    %v382 = vadd.f32 %v371, %v380
    %v383 = vadd.f32 %v372, %v380
    %v384 = vadd.f32 %v373, %v380
    %v385 = vadd.f32 %v374, %v380
    %v386 = vmax.f32 %v382, 0.0
    %v387 = vmax.f32 %v383, 0.0
    %v388 = vmax.f32 %v384, 0.0
    %v389 = vmax.f32 %v385, 0.0
    %390 = vst.msk [vmem:[#allocation5] sm:$0xff] %vm74, %v386
    %391 = vst.msk [vmem:[#allocation5 + $0x8] sm:$0xff] %vm74, %v387
    %392 = vst.msk [vmem:[#allocation5 + $0x10] sm:$0xff] %vm74, %v388
    %393 = vst.msk [vmem:[#allocation5 + $0x18] sm:$0xff] %vm74, %v389
    // Predicated region
    $region26: #{tpu_custom_call.1} parent=1 // pred_check
      _
    $region27: #{tpu_custom_call.1} parent=1 // pred_check_branch
      %395 = sbr.rel (0) target = $region29
    $region28: #{tpu_custom_call.1} parent=1 // pred_region
      %s397 = ssub.s32 512, 512
      %398 = vsyncadd [#allocation4], %s397
      %s399 = sshll.u32 [#allocation5], 4
      %s400 = int_to_ptr.vmem [resolvable:$true] %s399
      %405 = dma.vmem_to_hbm [thread:$0]  %s400, 512, %s5, [#allocation4], 128, 128, 8
    $region29: #{tpu_custom_call.1} parent=1 // pred_fallthru
      _
    // Predicated region
    $region30: #{tpu_custom_call.1} parent=1 // pred_check
      _
    $region31: #{tpu_custom_call.1} parent=1 // pred_check_branch
      %407 = sbr.rel (0) target = $region33
    $region32: #{tpu_custom_call.1} parent=1 // pred_region
      %408 = dma.done [#allocation4], 512
    $region33: #{tpu_custom_call.1} parent=1 // pred_fallthru
      _
    %409 = vsyncpa [#allocation3], 1
    %410 = vsyncpa [#allocation4], 1

</llo_original>
